<compile_context>
chip_gen: v7x
topology: tpu7x:2x2x1
jax: 0.10.0
libtpu: 0.0.40
codegen_flags: <defaults>
</compile_context>

<pallas_src>
import functools

import numpy as np
import jax
import jax.numpy as jnp
from jax import lax
from jax.experimental import pallas as pl
from jax.experimental.pallas import tpu as pltpu


# ------------------------------ Pallas kernel ------------------------------ #

def _st_gcn_fused_kernel(x_ref, bk_ref, wg_ref, bgk_ref, t1_ref, wt_ref, b2_ref,
                         o_ref, hpad_ref,
                         *, NB, K, kt, pad, T, V, Tt, Cout):
    # x_ref    : (NB, Cin, T*V)  f32   input slab (also the identity residual)
    # bk_ref   : (K, CHW, CHW)   bf16  block-diagonal I_Tt (x) A_k
    # wg_ref   : (K*Cout, Cin)   bf16  stacked GCN weights, BN1 scale folded
    # bgk_ref  : (K*Cout, 1)     f32   GCN bias (BN1-scaled), added before A
    # t1_ref   : (Cout, 1)       f32   BN1 shift
    # wt_ref   : (kt, Cout, Cout) bf16 temporal weights, BN2 scale folded
    # b2_ref   : (Cout, 1)       f32   folded temporal bias + BN2 shift
    # o_ref    : (NB, Cout, T*V) f32   output slab
    # hpad_ref : (Cout, (T+2*pad)*V) f32 VMEM scratch, time-padded hidden slab
    f32, bf16 = jnp.float32, jnp.bfloat16
    TV = T * V
    CHW = Tt * V              # lanes per time chunk
    CH = T // Tt              # number of chunks (static)

    # Zero only the temporal halo lanes; the payload is fully rewritten below.
    if pad > 0:
        zeros_halo = jnp.zeros((Cout, pad * V), f32)
        hpad_ref[:, 0:pad * V] = zeros_halo
        hpad_ref[:, (pad + T) * V:(2 * pad + T) * V] = zeros_halo

    for b in range(NB):
        xb = x_ref[b]                                           # (Cin, T*V) f32

        # ---- GCN: stacked 1x1 conv + graph contraction + BN1 + ReLU --------
        for tc in range(CH):
            xs = xb[:, tc * CHW:(tc + 1) * CHW].astype(bf16)    # (Cin, CHW)
            z = jnp.dot(wg_ref[...], xs,
                        preferred_element_type=f32)             # (K*Cout, CHW)
            z = (z + bgk_ref[...]).astype(bf16)                 # bias goes through A
            acc = jnp.dot(z[0:Cout], bk_ref[0], preferred_element_type=f32)
            for k in range(1, K):
                acc = acc + jnp.dot(z[k * Cout:(k + 1) * Cout], bk_ref[k],
                                    preferred_element_type=f32)
            h = jnp.maximum(acc + t1_ref[...], 0.0)             # BN1 shift + ReLU
            o0 = pad * V + tc * CHW
            hpad_ref[:, o0:o0 + CHW] = h

        # ---- temporal (kt,1) conv + BN2 + residual + ReLU -------------------
        y = jnp.dot(wt_ref[0], hpad_ref[:, 0:TV].astype(bf16),
                    preferred_element_type=f32)
        for dt in range(1, kt):
            y = y + jnp.dot(wt_ref[dt],
                            hpad_ref[:, dt * V:dt * V + TV].astype(bf16),
                            preferred_element_type=f32)
        o_ref[b] = jnp.maximum(y + b2_ref[...] + xb, 0.0)


# ------------------------------ Host wrapper ------------------------------- #

def _mxu_lane_width(default=256):
    """Native MXU width: 128 on <= v5, 256 on v6e / v7x."""
    try:
        kind = jax.devices()[0].device_kind.lower()
    except Exception:
        return default
    if any(tag in kind for tag in ("v2", "v3", "v4", "v5")):
        return 128
    return default


def _pick_time_tile(T, V, max_lanes):
    """Largest divisor Tt of T with Tt*V <= max_lanes (bounds I_Tt (x) A size)."""
    best = 1
    for tt in range(1, T + 1):
        if T % tt == 0 and tt * V <= max_lanes:
            best = tt
    return best


def _pick_batch_block(N, max_nb=8):
    """Samples per grid step; keep 1 at small N so megacore still gets 2 steps."""
    if N <= 2:
        return 1
    best = 1
    for nb in range(1, min(N, max_nb) + 1):
        if N % nb == 0:
            best = nb
    return best


def st_gcn_block_forward(x, A, params, *, kt, pad):
    """Forward pass of ST_GCN_Block (residual=True, stride=1, dropout=0)."""
    N, Cin, T, V = x.shape
    K = A.shape[0]
    Wg = params["Wg"]                                   # (K, Cout, Cin)
    Cout = Wg.shape[1]
    assert Cin == Cout, "identity residual branch requires Cin == Cout"
    f32, bf16 = jnp.float32, jnp.bfloat16
    eps = 1e-5

    # Fold eval-mode BatchNorm into per-channel scale / shift.
    s1 = params["g1"] / jnp.sqrt(params["v1"] + eps)
    t1 = (params["b1"] - params["m1"] * s1).reshape(Cout, 1).astype(f32)
    s2 = params["g2"] / jnp.sqrt(params["v2"] + eps)
    t2 = params["b2"] - params["m2"] * s2

    # BN1 scale folded into the stacked GCN weights + bias (bias stays explicit
    # and is added in-kernel BEFORE the contraction with A, as in the module).
    Wg_stack = (Wg * s1[None, :, None]).reshape(K * Cout, Cin).astype(bf16)
    bgk = (params["bg"] * s1[None, :]).reshape(K * Cout, 1).astype(f32)

    # BN2 scale folded into the temporal conv weights; bias + shift folded.
    Wt_f = (s2[None, :, None] * params["Wt"]).astype(bf16)     # (kt, Cout, Cout)
    b2 = (s2 * params["bt"] + t2).reshape(Cout, 1).astype(f32)

    # Block-diagonal adjacency operator (lane-dense right matmul), sized to the
    # native MXU width and stored in bf16.
    Tt = _pick_time_tile(T, V, _mxu_lane_width())
    CHW = Tt * V
    Bk = (jnp.eye(Tt, dtype=f32)[None, :, None, :, None]
          * A.astype(f32)[:, None, :, None, :]).reshape(K, CHW, CHW).astype(bf16)

    NB = _pick_batch_block(N)
    x2 = x.reshape(N, Cin, T * V).astype(f32)                   # free reshape
    Tp = T + 2 * pad

    kernel = functools.partial(_st_gcn_fused_kernel, NB=NB, K=K, kt=kt, pad=pad,
                               T=T, V=V, Tt=Tt, Cout=Cout)
    out2 = pl.pallas_call(
        kernel,
        out_shape=jax.ShapeDtypeStruct((N, Cout, T * V), f32),
        grid_spec=pltpu.PrefetchScalarGridSpec(
            num_scalar_prefetch=0,
            grid=(N // NB,),
            in_specs=[
                pl.BlockSpec((NB, Cin, T * V), lambda n: (n, 0, 0)),   # x / residual
                pl.BlockSpec((K, CHW, CHW), lambda n: (0, 0, 0)),      # I_Tt (x) A_k
                pl.BlockSpec((K * Cout, Cin), lambda n: (0, 0)),       # stacked Wg
                pl.BlockSpec((K * Cout, 1), lambda n: (0, 0)),         # GCN bias
                pl.BlockSpec((Cout, 1), lambda n: (0, 0)),             # BN1 shift
                pl.BlockSpec((kt, Cout, Cout), lambda n: (0, 0, 0)),   # temporal W
                pl.BlockSpec((Cout, 1), lambda n: (0, 0)),             # folded b2
            ],
            out_specs=pl.BlockSpec((NB, Cout, T * V), lambda n: (n, 0, 0)),
            scratch_shapes=[
                pltpu.VMEM((Cout, Tp * V), f32),    # time-padded hidden slab
            ],
        ),
        compiler_params=pltpu.CompilerParams(
            dimension_semantics=("parallel",),
            vmem_limit_bytes=32 * 1024 * 1024),     # ample at these shapes
    )(x2, Bk, Wg_stack, bgk, t1, Wt_f, b2)

    out = out2.reshape(N, Cout, T, V)                           # free reshape
    return out, A


# ------------------------- Deterministic parameters ------------------------ #

def init_params(key, Cin, Cout, K, kt):
    ks = jax.random.split(key, 12)
    sc = 0.2
    return {
        "Wg": sc * jax.random.normal(ks[0], (K, Cout, Cin), jnp.float32),
        "bg": sc * jax.random.normal(ks[1], (K, Cout), jnp.float32),
        "Wt": sc * jax.random.normal(ks[2], (kt, Cout, Cout), jnp.float32),
        "bt": sc * jax.random.normal(ks[3], (Cout,), jnp.float32),
        "g1": 1.0 + 0.1 * jax.random.normal(ks[4], (Cout,), jnp.float32),
        "b1": 0.1 * jax.random.normal(ks[5], (Cout,), jnp.float32),
        "m1": 0.1 * jax.random.normal(ks[6], (Cout,), jnp.float32),
        "v1": 1.0 + 0.1 * jax.random.uniform(ks[7], (Cout,), jnp.float32),
        "g2": 1.0 + 0.1 * jax.random.normal(ks[8], (Cout,), jnp.float32),
        "b2": 0.1 * jax.random.normal(ks[9], (Cout,), jnp.float32),
        "m2": 0.1 * jax.random.normal(ks[10], (Cout,), jnp.float32),
        "v2": 1.0 + 0.1 * jax.random.uniform(ks[11], (Cout,), jnp.float32),
    }


# ---------------------------- Pure-JAX reference --------------------------- #

def reference_forward(x, A, params, *, kt, pad):
    N, Cin, T, V = x.shape
    eps = 1e-5
    hi = lax.Precision.HIGHEST
    Wg, bg = params["Wg"], params["bg"]
    xc = jnp.einsum("kci,nitv->nkctv", Wg, x, precision=hi) \
        + bg[None, :, :, None, None]
    g = jnp.einsum("nkctv,kvw->nctw", xc, A, precision=hi)
    s1 = params["g1"] / jnp.sqrt(params["v1"] + eps)
    t1 = params["b1"] - params["m1"] * s1
    h = jnp.maximum(g * s1[None, :, None, None] + t1[None, :, None, None], 0.0)
    hp = jnp.pad(h, ((0, 0), (0, 0), (pad, pad), (0, 0)))
    Wt, bt = params["Wt"], params["bt"]
    ct = jnp.zeros_like(g)
    for dt in range(kt):
        ct = ct + jnp.einsum("cd,ndtv->nctv", Wt[dt],
                             hp[:, :, dt:dt + T, :], precision=hi)
    ct = ct + bt[None, :, None, None]
    s2 = params["g2"] / jnp.sqrt(params["v2"] + eps)
    t2 = params["b2"] - params["m2"] * s2
    out = ct * s2[None, :, None, None] + t2[None, :, None, None] + x
    return jnp.maximum(out, 0.0), A


# ----------------------------------- main ----------------------------------- #

if __name__ == "__main__":
    N, Cin, Cout, T, V, K, kt = 2, 8, 8, 16, 16, 3, 3
    pad = (kt - 1) // 2

    key = jax.random.PRNGKey(0)
    kx, ka, kp = jax.random.split(key, 3)
    x = jax.random.normal(kx, (N, Cin, T, V), jnp.float32)
    A = jax.random.uniform(ka, (K, V, V), jnp.float32)
    A = A / jnp.sum(A, axis=-1, keepdims=True)     # row-normalized adjacency
    params = init_params(kp, Cin, Cout, K, kt)

    out, A_out = st_gcn_block_forward(x, A, params, kt=kt, pad=pad)
    out = jax.block_until_ready(out)

    ref, _ = reference_forward(x, A, params, kt=kt, pad=pad)
    np.testing.assert_allclose(np.asarray(out), np.asarray(ref),
                               rtol=2e-2, atol=2e-2)
    print("KERNEL_OK")
</pallas_src>

<mosaic_0001>
module attributes {stable_mosaic.version = 11 : i64} {
  func.func @_st_gcn_fused_kernel(%arg0: i32, %arg1: memref<1x8x256xf32, #tpu.memory_space<vmem>>, %arg2: memref<3x256x256xbf16, #tpu.memory_space<vmem>>, %arg3: memref<24x8xbf16, #tpu.memory_space<vmem>>, %arg4: memref<24x1xf32, #tpu.memory_space<vmem>>, %arg5: memref<8x1xf32, #tpu.memory_space<vmem>>, %arg6: memref<3x8x8xbf16, #tpu.memory_space<vmem>>, %arg7: memref<8x1xf32, #tpu.memory_space<vmem>>, %arg8: memref<1x8x256xf32, #tpu.memory_space<vmem>>, %arg9: memref<8x288xf32, #tpu.memory_space<vmem>>) attributes {dimension_semantics = [#tpu.dimension_semantics<parallel>], iteration_bounds = array<i64: 2>, scalar_prefetch = 0 : i64, scratch_operands = 1 : i64, tpu.core_type = #tpu.core_type<tc>, window_params = [{transform_indices = @transform_0, window_bounds = array<i64: 1, 8, 256>}, {pipeline_mode = #tpu.pipeline_mode<synchronous>, transform_indices = @transform_1, window_bounds = array<i64: 3, 256, 256>}, {pipeline_mode = #tpu.pipeline_mode<synchronous>, transform_indices = @transform_2, window_bounds = array<i64: 24, 8>}, {pipeline_mode = #tpu.pipeline_mode<synchronous>, transform_indices = @transform_3, window_bounds = array<i64: 24, 1>}, {pipeline_mode = #tpu.pipeline_mode<synchronous>, transform_indices = @transform_4, window_bounds = array<i64: 8, 1>}, {pipeline_mode = #tpu.pipeline_mode<synchronous>, transform_indices = @transform_5, window_bounds = array<i64: 3, 8, 8>}, {pipeline_mode = #tpu.pipeline_mode<synchronous>, transform_indices = @transform_6, window_bounds = array<i64: 8, 1>}, {transform_indices = @transform_7, window_bounds = array<i64: 1, 8, 256>}]} {
    %cst = arith.constant 0.000000e+00 : f32
    %0 = vector.broadcast %cst : f32 to vector<8x16xf32>
    %c0 = arith.constant 0 : index
    %c0_0 = arith.constant 0 : index
    %1 = vector.load %arg9[%c0, %c0_0] : memref<8x288xf32, #tpu.memory_space<vmem>>, vector<8x16xf32>
    tpu.vector_store %arg9[%c0, %c0_0], %0 {strides = array<i32>} : memref<8x288xf32, #tpu.memory_space<vmem>>, vector<8x16xf32>,
    %c0_1 = arith.constant 0 : index
    %c272 = arith.constant 272 : index
    %2 = vector.load %arg9[%c0_1, %c272] : memref<8x288xf32, #tpu.memory_space<vmem>>, vector<8x16xf32>
    tpu.vector_store %arg9[%c0_1, %c272], %0 {strides = array<i32>} : memref<8x288xf32, #tpu.memory_space<vmem>>, vector<8x16xf32>,
    %c0_2 = arith.constant 0 : index
    %c0_3 = arith.constant 0 : index
    %c0_4 = arith.constant 0 : index
    %3 = vector.load %arg1[%c0_2, %c0_3, %c0_4] : memref<1x8x256xf32, #tpu.memory_space<vmem>>, vector<1x8x256xf32>
    %4 = vector.shape_cast %3 : vector<1x8x256xf32> to vector<8x256xf32>
    %5 = arith.truncf %4 : vector<8x256xf32> to vector<8x256xbf16>
    %c0_5 = arith.constant 0 : index
    %c0_6 = arith.constant 0 : index
    %6 = vector.load %arg3[%c0_5, %c0_6] : memref<24x8xbf16, #tpu.memory_space<vmem>>, vector<24x8xbf16>
    %cst_7 = arith.constant dense<0.000000e+00> : vector<24x256xf32>
    %7 = tpu.matmul %6, %5, %cst_7 {dimension_numbers = #tpu.dot_dimension_numbers<[1], [0], [0], [1], [0, 0, 1, 1], [], []>} : vector<24x8xbf16>, vector<8x256xbf16>, vector<24x256xf32> -> vector<24x256xf32>
    %c0_8 = arith.constant 0 : index
    %c0_9 = arith.constant 0 : index
    %8 = vector.load %arg4[%c0_8, %c0_9] : memref<24x1xf32, #tpu.memory_space<vmem>>, vector<24x1xf32>
    %9 = vector.broadcast %8 : vector<24x1xf32> to vector<24x256xf32>
    %10 = arith.addf %7, %9 : vector<24x256xf32>
    %11 = arith.truncf %10 : vector<24x256xf32> to vector<24x256xbf16>
    %12 = vector.extract_strided_slice %11 {offsets = [0, 0], sizes = [8, 256], strides = [1, 1]} : vector<24x256xbf16> to vector<8x256xbf16>
    %c0_10 = arith.constant 0 : index
    %c0_11 = arith.constant 0 : index
    %c0_12 = arith.constant 0 : index
    %13 = vector.load %arg2[%c0_10, %c0_11, %c0_12] : memref<3x256x256xbf16, #tpu.memory_space<vmem>>, vector<1x256x256xbf16>
    %14 = vector.shape_cast %13 : vector<1x256x256xbf16> to vector<256x256xbf16>
    %cst_13 = arith.constant dense<0.000000e+00> : vector<8x256xf32>
    %15 = tpu.matmul %12, %14, %cst_13 {dimension_numbers = #tpu.dot_dimension_numbers<[1], [0], [0], [1], [0, 0, 1, 1], [], []>} : vector<8x256xbf16>, vector<256x256xbf16>, vector<8x256xf32> -> vector<8x256xf32>
    %16 = vector.extract_strided_slice %11 {offsets = [8, 0], sizes = [8, 256], strides = [1, 1]} : vector<24x256xbf16> to vector<8x256xbf16>
    %c1 = arith.constant 1 : index
    %c0_14 = arith.constant 0 : index
    %c0_15 = arith.constant 0 : index
    %17 = vector.load %arg2[%c1, %c0_14, %c0_15] : memref<3x256x256xbf16, #tpu.memory_space<vmem>>, vector<1x256x256xbf16>
    %18 = vector.shape_cast %17 : vector<1x256x256xbf16> to vector<256x256xbf16>
    %cst_16 = arith.constant dense<0.000000e+00> : vector<8x256xf32>
    %19 = tpu.matmul %16, %18, %cst_16 {dimension_numbers = #tpu.dot_dimension_numbers<[1], [0], [0], [1], [0, 0, 1, 1], [], []>} : vector<8x256xbf16>, vector<256x256xbf16>, vector<8x256xf32> -> vector<8x256xf32>
    %20 = arith.addf %15, %19 : vector<8x256xf32>
    %21 = vector.extract_strided_slice %11 {offsets = [16, 0], sizes = [8, 256], strides = [1, 1]} : vector<24x256xbf16> to vector<8x256xbf16>
    %c2 = arith.constant 2 : index
    %c0_17 = arith.constant 0 : index
    %c0_18 = arith.constant 0 : index
    %22 = vector.load %arg2[%c2, %c0_17, %c0_18] : memref<3x256x256xbf16, #tpu.memory_space<vmem>>, vector<1x256x256xbf16>
    %23 = vector.shape_cast %22 : vector<1x256x256xbf16> to vector<256x256xbf16>
    %cst_19 = arith.constant dense<0.000000e+00> : vector<8x256xf32>
    %24 = tpu.matmul %21, %23, %cst_19 {dimension_numbers = #tpu.dot_dimension_numbers<[1], [0], [0], [1], [0, 0, 1, 1], [], []>} : vector<8x256xbf16>, vector<256x256xbf16>, vector<8x256xf32> -> vector<8x256xf32>
    %25 = arith.addf %20, %24 : vector<8x256xf32>
    %c0_20 = arith.constant 0 : index
    %c0_21 = arith.constant 0 : index
    %26 = vector.load %arg5[%c0_20, %c0_21] : memref<8x1xf32, #tpu.memory_space<vmem>>, vector<8x1xf32>
    %27 = vector.broadcast %26 : vector<8x1xf32> to vector<8x256xf32>
    %28 = arith.addf %25, %27 : vector<8x256xf32>
    %cst_22 = arith.constant 0.000000e+00 : f32
    %29 = vector.broadcast %cst_22 : f32 to vector<8x256xf32>
    %30 = arith.maximumf %28, %29 : vector<8x256xf32>
    %c0_23 = arith.constant 0 : index
    %c16 = arith.constant 16 : index
    %31 = vector.load %arg9[%c0_23, %c16] : memref<8x288xf32, #tpu.memory_space<vmem>>, vector<8x256xf32>
    tpu.vector_store %arg9[%c0_23, %c16], %30 {strides = array<i32>} : memref<8x288xf32, #tpu.memory_space<vmem>>, vector<8x256xf32>,
    %c0_24 = arith.constant 0 : index
    %c0_25 = arith.constant 0 : index
    %c0_26 = arith.constant 0 : index
    %32 = vector.load %arg6[%c0_24, %c0_25, %c0_26] : memref<3x8x8xbf16, #tpu.memory_space<vmem>>, vector<1x8x8xbf16>
    %33 = vector.shape_cast %32 : vector<1x8x8xbf16> to vector<8x8xbf16>
    %c0_27 = arith.constant 0 : index
    %c0_28 = arith.constant 0 : index
    %34 = vector.load %arg9[%c0_27, %c0_28] : memref<8x288xf32, #tpu.memory_space<vmem>>, vector<8x256xf32>
    %35 = arith.truncf %34 : vector<8x256xf32> to vector<8x256xbf16>
    %cst_29 = arith.constant dense<0.000000e+00> : vector<8x256xf32>
    %36 = tpu.matmul %33, %35, %cst_29 {dimension_numbers = #tpu.dot_dimension_numbers<[1], [0], [0], [1], [0, 0, 1, 1], [], []>} : vector<8x8xbf16>, vector<8x256xbf16>, vector<8x256xf32> -> vector<8x256xf32>
    %c1_30 = arith.constant 1 : index
    %c0_31 = arith.constant 0 : index
    %c0_32 = arith.constant 0 : index
    %37 = vector.load %arg6[%c1_30, %c0_31, %c0_32] : memref<3x8x8xbf16, #tpu.memory_space<vmem>>, vector<1x8x8xbf16>
    %38 = vector.shape_cast %37 : vector<1x8x8xbf16> to vector<8x8xbf16>
    %c0_33 = arith.constant 0 : index
    %c16_34 = arith.constant 16 : index
    %39 = vector.load %arg9[%c0_33, %c16_34] : memref<8x288xf32, #tpu.memory_space<vmem>>, vector<8x256xf32>
    %40 = arith.truncf %39 : vector<8x256xf32> to vector<8x256xbf16>
    %cst_35 = arith.constant dense<0.000000e+00> : vector<8x256xf32>
    %41 = tpu.matmul %38, %40, %cst_35 {dimension_numbers = #tpu.dot_dimension_numbers<[1], [0], [0], [1], [0, 0, 1, 1], [], []>} : vector<8x8xbf16>, vector<8x256xbf16>, vector<8x256xf32> -> vector<8x256xf32>
    %42 = arith.addf %36, %41 : vector<8x256xf32>
    %c2_36 = arith.constant 2 : index
    %c0_37 = arith.constant 0 : index
    %c0_38 = arith.constant 0 : index
    %43 = vector.load %arg6[%c2_36, %c0_37, %c0_38] : memref<3x8x8xbf16, #tpu.memory_space<vmem>>, vector<1x8x8xbf16>
    %44 = vector.shape_cast %43 : vector<1x8x8xbf16> to vector<8x8xbf16>
    %c0_39 = arith.constant 0 : index
    %c32 = arith.constant 32 : index
    %45 = vector.load %arg9[%c0_39, %c32] : memref<8x288xf32, #tpu.memory_space<vmem>>, vector<8x256xf32>
    %46 = arith.truncf %45 : vector<8x256xf32> to vector<8x256xbf16>
    %cst_40 = arith.constant dense<0.000000e+00> : vector<8x256xf32>
    %47 = tpu.matmul %44, %46, %cst_40 {dimension_numbers = #tpu.dot_dimension_numbers<[1], [0], [0], [1], [0, 0, 1, 1], [], []>} : vector<8x8xbf16>, vector<8x256xbf16>, vector<8x256xf32> -> vector<8x256xf32>
    %48 = arith.addf %42, %47 : vector<8x256xf32>
    %c0_41 = arith.constant 0 : index
    %c0_42 = arith.constant 0 : index
    %49 = vector.load %arg7[%c0_41, %c0_42] : memref<8x1xf32, #tpu.memory_space<vmem>>, vector<8x1xf32>
    %50 = vector.broadcast %49 : vector<8x1xf32> to vector<8x256xf32>
    %51 = arith.addf %48, %50 : vector<8x256xf32>
    %52 = arith.addf %51, %4 : vector<8x256xf32>
    %cst_43 = arith.constant 0.000000e+00 : f32
    %53 = vector.broadcast %cst_43 : f32 to vector<8x256xf32>
    %54 = arith.maximumf %52, %53 : vector<8x256xf32>
    %c0_44 = arith.constant 0 : index
    %c0_45 = arith.constant 0 : index
    %c0_46 = arith.constant 0 : index
    %55 = vector.load %arg8[%c0_44, %c0_45, %c0_46] : memref<1x8x256xf32, #tpu.memory_space<vmem>>, vector<1x8x256xf32>
    %56 = vector.shape_cast %55 : vector<1x8x256xf32> to vector<8x256xf32>
    %57 = vector.shape_cast %54 : vector<8x256xf32> to vector<1x8x256xf32>
    tpu.vector_store %arg8[%c0_44, %c0_45, %c0_46], %57 {strides = array<i32>} : memref<1x8x256xf32, #tpu.memory_space<vmem>>, vector<1x8x256xf32>,
    return
  }
  func.func @transform_0(%arg0: i32) -> (i32, i32, i32) {
    %c0_i32 = arith.constant 0 : i32
    %c0_i32_0 = arith.constant 0 : i32
    %c0_i32_1 = arith.constant 0 : i32
    return %arg0, %c0_i32, %c0_i32_0 : i32, i32, i32
  }
  func.func @transform_1(%arg0: i32) -> (i32, i32, i32) {
    %c0_i32 = arith.constant 0 : i32
    %c0_i32_0 = arith.constant 0 : i32
    %c0_i32_1 = arith.constant 0 : i32
    %c0_i32_2 = arith.constant 0 : i32
    return %c0_i32, %c0_i32_0, %c0_i32_1 : i32, i32, i32
  }
  func.func @transform_2(%arg0: i32) -> (i32, i32) {
    %c0_i32 = arith.constant 0 : i32
    %c0_i32_0 = arith.constant 0 : i32
    %c0_i32_1 = arith.constant 0 : i32
    return %c0_i32, %c0_i32_0 : i32, i32
  }
  func.func @transform_3(%arg0: i32) -> (i32, i32) {
    %c0_i32 = arith.constant 0 : i32
    %c0_i32_0 = arith.constant 0 : i32
    %c0_i32_1 = arith.constant 0 : i32
    return %c0_i32, %c0_i32_0 : i32, i32
  }
  func.func @transform_4(%arg0: i32) -> (i32, i32) {
    %c0_i32 = arith.constant 0 : i32
    %c0_i32_0 = arith.constant 0 : i32
    %c0_i32_1 = arith.constant 0 : i32
    return %c0_i32, %c0_i32_0 : i32, i32
  }
  func.func @transform_5(%arg0: i32) -> (i32, i32, i32) {
    %c0_i32 = arith.constant 0 : i32
    %c0_i32_0 = arith.constant 0 : i32
    %c0_i32_1 = arith.constant 0 : i32
    %c0_i32_2 = arith.constant 0 : i32
    return %c0_i32, %c0_i32_0, %c0_i32_1 : i32, i32, i32
  }
  func.func @transform_6(%arg0: i32) -> (i32, i32) {
    %c0_i32 = arith.constant 0 : i32
    %c0_i32_0 = arith.constant 0 : i32
    %c0_i32_1 = arith.constant 0 : i32
    return %c0_i32, %c0_i32_0 : i32, i32
  }
  func.func @transform_7(%arg0: i32) -> (i32, i32, i32) {
    %c0_i32 = arith.constant 0 : i32
    %c0_i32_0 = arith.constant 0 : i32
    %c0_i32_1 = arith.constant 0 : i32
    return %arg0, %c0_i32, %c0_i32_0 : i32, i32, i32
  }
}

</mosaic_0001>

<llo_original>
// kernel: tpu_custom_call.1
$region0: #{tpu_custom_call.1}
  #allocation0 [shape = 'u32[]', space=smem, size = 0x4, offset = 0x4, fixed_abs, tag = 'smem constant byte address 0x4 - core index']
  #allocation1 [shape = 'u32[144,128]{1,0:T(1,128)}', space=vmem, size = 0x12000, scoped, tag = 'internal scratch']
  #allocation2 [shape = 'f32[8,288]{1,0:T(8,128)}', space=vmem, size = 0x3000, scoped, tag = 'scratch operand']
  %s0 = inlined_call_operand.vmem [shape: f32[2,8,256], index: 0, kind: input, shape index: {}]
  %s1 = inlined_call_operand.hbm [shape: bf16[3,256,256], index: 1, kind: input, shape index: {}]
  %s2 = inlined_call_operand.vmem [shape: bf16[24,8], index: 2, kind: input, shape index: {}]
  %s3 = inlined_call_operand.vmem [shape: f32[24,1], index: 3, kind: input, shape index: {}]
  %s4 = inlined_call_operand.vmem [shape: f32[8,1], index: 4, kind: input, shape index: {}]
  %s5 = inlined_call_operand.vmem [shape: bf16[3,8,8], index: 5, kind: input, shape index: {}]
  %s6 = inlined_call_operand.vmem [shape: f32[8,1], index: 6, kind: input, shape index: {}]
  %s7 = inlined_call_operand.hbm [shape: f32[2,8,256], index: 7, kind: output, shape index: {}]
  %s8 = sld [smem:[#allocation0]]
  $region65: #{tpu_custom_call.1} parent=0
    _
  %s10 = ssub.s32 1, %s8
  %s11 = scalar_select 0, %s10, %s8
  $region1: #{tpu_custom_call.1} parent=0
    #allocation3 [shape = 'u8[393216]{0}', space=vmem, size = 0x60000, scoped, tag = 'input window, operand 1, single buffered']
    #allocation4 [shape = 's32[2]{0}', space=sflag, size = 0x8, scoped, tag = 'scoped memory for tpu_custom_call.1']
    #allocation5 [shape = 's32[2]{0}', space=sflag, size = 0x8, scoped, tag = 'scoped memory for tpu_custom_call.1']
    #allocation6 [shape = 'u8[16384]{0}', space=vmem, size = 0x4000, scoped, tag = 'output window, operand 0']
    %12 = vsyncpa [#allocation4], 0
    %13 = vsyncpa [#allocation5], 0
    %s14 = scalar_lea.sflag [#allocation5], 1
    %15 = vsyncpa %s14, 0
    loop: start=0, step=1, limit=4
    $region2: #{tpu_custom_call.1} parent=1 // loop_pre_header
      _
    $region3: #{tpu_custom_call.1} parent=1 // loop_header
      %s17 = sphi 0, %s21
      %p18 = scmp.ge.s32.totalorder %s17, 4
      %s27 = sphi 0, %s29
      %s30 = sphi 0, %s27
      %s31 = sphi 0, %s30
      %s47 = sphi 0, %s31
      %s51 = sphi 0, %s51
      %s53 = sphi 0, %s51
      %s54 = sphi 0, %s53
      %s68 = sphi 0, %s54
      %s72 = sphi 0, %s72
      %s74 = sphi 0, %s72
      %s75 = sphi 0, %s74
      %s89 = sphi 0, %s75
      %s93 = sphi 0, %s93
      %s95 = sphi 0, %s93
      %s96 = sphi 0, %s95
      %s110 = sphi 0, %s96
      %s114 = sphi 0, %s114
      %s116 = sphi 0, %s114
      %s117 = sphi 0, %s116
      %s131 = sphi 0, %s117
      %s135 = sphi 0, %s135
      %s137 = sphi 0, %s135
      %s138 = sphi 0, %s137
      %s152 = sphi 0, %s138
      %s156 = sphi 0, %s156
      %s158 = sphi 0, %s156
      %s159 = sphi 0, %s158
      %s173 = sphi 0, %s159
      %s179 = sphi 0, %s181
      %s182 = sphi 0, %s179
      %s183 = sphi 0, %s182
      %s199 = sphi 0, %s183
    $region4: #{tpu_custom_call.1} parent=1 // loop_header_branch
      %20 = sbr.rel (%p18) target = $region8
    $region5: #{tpu_custom_call.1} parent=1 // loop_body
      %s22 = ssub.s32 %s17, 1
      %s23 = ssub.s32 %s17, 2
      %s24 = sadd.s32 %s17, 1
      %s25 = ssub.s32 %s17, %s24
      %p26 = scmp.eq.s32.totalorder %s25, 0
      %s28 = sadd.s32 %s27, 1
      %s29 = scalar_select %p26, %s27, %s28
      %p32 = pneg %p26
      %p33 = scmp.eq.s32.totalorder %s17, 1
      %p34 = por %p32, %p33
      %p35 = scmp.ne.s32.totalorder %s27, %s30
      %p36 = scmp.eq.s32.totalorder %s17, 0
      %p37 = por %p35, %p36
      %p38 = scmp.ne.s32.totalorder %s27, %s30
      %p39 = scmp.eq.s32.totalorder %s22, 1
      %p40 = por %p38, %p39
      %p41 = scmp.ne.s32.totalorder %s30, %s31
      %p42 = scmp.eq.s32.totalorder %s22, 0
      %p43 = por %p41, %p42
      %p44 = scmp.ne.s32.totalorder %s30, %s31
      %p45 = scmp.eq.s32.totalorder %s23, 1
      %p46 = por %p44, %p45
      %p48 = scmp.ne.s32.totalorder %s31, %s47
      %p49 = scmp.eq.s32.totalorder %s23, 0
      %p50 = por %p48, %p49
      %s52 = sadd.s32 %s51, 1
      %p55 = scmp.eq.s32.totalorder %s17, 1
      %p56 = scmp.ne.s32.totalorder %s51, %s53
      %p57 = scmp.eq.s32.totalorder %s17, 0
      %p58 = por %p56, %p57
      %p59 = scmp.ne.s32.totalorder %s51, %s53
      %p60 = scmp.eq.s32.totalorder %s22, 1
      %p61 = por %p59, %p60
      %p62 = scmp.ne.s32.totalorder %s53, %s54
      %p63 = scmp.eq.s32.totalorder %s22, 0
      %p64 = por %p62, %p63
      %p65 = scmp.ne.s32.totalorder %s53, %s54
      %p66 = scmp.eq.s32.totalorder %s23, 1
      %p67 = por %p65, %p66
      %p69 = scmp.ne.s32.totalorder %s54, %s68
      %p70 = scmp.eq.s32.totalorder %s23, 0
      %p71 = por %p69, %p70
      %s73 = sadd.s32 %s72, 1
      %p76 = scmp.eq.s32.totalorder %s17, 1
      %p77 = scmp.ne.s32.totalorder %s72, %s74
      %p78 = scmp.eq.s32.totalorder %s17, 0
      %p79 = por %p77, %p78
      %p80 = scmp.ne.s32.totalorder %s72, %s74
      %p81 = scmp.eq.s32.totalorder %s22, 1
      %p82 = por %p80, %p81
      %p83 = scmp.ne.s32.totalorder %s74, %s75
      %p84 = scmp.eq.s32.totalorder %s22, 0
      %p85 = por %p83, %p84
      %p86 = scmp.ne.s32.totalorder %s74, %s75
      %p87 = scmp.eq.s32.totalorder %s23, 1
      %p88 = por %p86, %p87
      %p90 = scmp.ne.s32.totalorder %s75, %s89
      %p91 = scmp.eq.s32.totalorder %s23, 0
      %p92 = por %p90, %p91
      %s94 = sadd.s32 %s93, 1
      %p97 = scmp.eq.s32.totalorder %s17, 1
      %p98 = scmp.ne.s32.totalorder %s93, %s95
      %p99 = scmp.eq.s32.totalorder %s17, 0
      %p100 = por %p98, %p99
      %p101 = scmp.ne.s32.totalorder %s93, %s95
      %p102 = scmp.eq.s32.totalorder %s22, 1
      %p103 = por %p101, %p102
      %p104 = scmp.ne.s32.totalorder %s95, %s96
      %p105 = scmp.eq.s32.totalorder %s22, 0
      %p106 = por %p104, %p105
      %p107 = scmp.ne.s32.totalorder %s95, %s96
      %p108 = scmp.eq.s32.totalorder %s23, 1
      %p109 = por %p107, %p108
      %p111 = scmp.ne.s32.totalorder %s96, %s110
      %p112 = scmp.eq.s32.totalorder %s23, 0
      %p113 = por %p111, %p112
      %s115 = sadd.s32 %s114, 1
      %p118 = scmp.eq.s32.totalorder %s17, 1
      %p119 = scmp.ne.s32.totalorder %s114, %s116
      %p120 = scmp.eq.s32.totalorder %s17, 0
      %p121 = por %p119, %p120
      %p122 = scmp.ne.s32.totalorder %s114, %s116
      %p123 = scmp.eq.s32.totalorder %s22, 1
      %p124 = por %p122, %p123
      %p125 = scmp.ne.s32.totalorder %s116, %s117
      %p126 = scmp.eq.s32.totalorder %s22, 0
      %p127 = por %p125, %p126
      %p128 = scmp.ne.s32.totalorder %s116, %s117
      %p129 = scmp.eq.s32.totalorder %s23, 1
      %p130 = por %p128, %p129
      %p132 = scmp.ne.s32.totalorder %s117, %s131
      %p133 = scmp.eq.s32.totalorder %s23, 0
      %p134 = por %p132, %p133
      %s136 = sadd.s32 %s135, 1
      %p139 = scmp.eq.s32.totalorder %s17, 1
      %p140 = scmp.ne.s32.totalorder %s135, %s137
      %p141 = scmp.eq.s32.totalorder %s17, 0
      %p142 = por %p140, %p141
      %p143 = scmp.ne.s32.totalorder %s135, %s137
      %p144 = scmp.eq.s32.totalorder %s22, 1
      %p145 = por %p143, %p144
      %p146 = scmp.ne.s32.totalorder %s137, %s138
      %p147 = scmp.eq.s32.totalorder %s22, 0
      %p148 = por %p146, %p147
      %p149 = scmp.ne.s32.totalorder %s137, %s138
      %p150 = scmp.eq.s32.totalorder %s23, 1
      %p151 = por %p149, %p150
      %p153 = scmp.ne.s32.totalorder %s138, %s152
      %p154 = scmp.eq.s32.totalorder %s23, 0
      %p155 = por %p153, %p154
      %s157 = sadd.s32 %s156, 1
      %p160 = scmp.eq.s32.totalorder %s17, 1
      %p161 = scmp.ne.s32.totalorder %s156, %s158
      %p162 = scmp.eq.s32.totalorder %s17, 0
      %p163 = por %p161, %p162
      %p164 = scmp.ne.s32.totalorder %s156, %s158
      %p165 = scmp.eq.s32.totalorder %s22, 1
      %p166 = por %p164, %p165
      %p167 = scmp.ne.s32.totalorder %s158, %s159
      %p168 = scmp.eq.s32.totalorder %s22, 0
      %p169 = por %p167, %p168
      %p170 = scmp.ne.s32.totalorder %s158, %s159
      %p171 = scmp.eq.s32.totalorder %s23, 1
      %p172 = por %p170, %p171
      %p174 = scmp.ne.s32.totalorder %s159, %s173
      %p175 = scmp.eq.s32.totalorder %s23, 0
      %p176 = por %p174, %p175
      %s177 = ssub.s32 %s17, %s24
      %p178 = scmp.eq.s32.totalorder %s177, 0
      %s180 = sadd.s32 %s179, 1
      %s181 = scalar_select %p178, %s179, %s180
      %p184 = pneg %p178
      %p185 = scmp.eq.s32.totalorder %s17, 1
      %p186 = por %p184, %p185
      %p187 = scmp.ne.s32.totalorder %s179, %s182
      %p188 = scmp.eq.s32.totalorder %s17, 0
      %p189 = por %p187, %p188
      %p190 = scmp.ne.s32.totalorder %s179, %s182
      %p191 = scmp.eq.s32.totalorder %s22, 1
      %p192 = por %p190, %p191
      %p193 = scmp.ne.s32.totalorder %s182, %s183
      %p194 = scmp.eq.s32.totalorder %s22, 0
      %p195 = por %p193, %p194
      %p196 = scmp.ne.s32.totalorder %s182, %s183
      %p197 = scmp.eq.s32.totalorder %s23, 1
      %p198 = por %p196, %p197
      %p200 = scmp.ne.s32.totalorder %s183, %s199
      %p201 = scmp.eq.s32.totalorder %s23, 0
      %p202 = por %p200, %p201
      %p203 = scmp.le.s32.totalorder 1, %s17
      %p204 = scmp.lt.s32.totalorder %s17, 3
      %p205 = pnand %p203, %p204
      %p206 = pneg %p205
      // Predicated region
      $region9: #{tpu_custom_call.1} parent=5 // pred_check
        _
      $region10: #{tpu_custom_call.1} parent=5 // pred_check_branch
        %208 = sbr.rel (%p205) target = $region12
      $region11: #{tpu_custom_call.1} parent=5 // pred_region
        %s209 = ssub.s32 %s17, 1
        // Predicated region
        $region13: #{tpu_custom_call.1} parent=11 // pred_check
          %p210 = pneg %p64
        $region14: #{tpu_custom_call.1} parent=11 // pred_check_branch
          %212 = sbr.rel (%p210) target = $region16
        $region15: #{tpu_custom_call.1} parent=11 // pred_region
          %s214 = ssub.s32 12288, 12288
          %215 = vsyncadd [#allocation4], %s214
          %s216 = sshll.u32 [#allocation3], 4
          %s217 = int_to_ptr.vmem [resolvable:$true] %s216
          %222 = dma.hbm_to_vmem [thread:$0]  %s1, 12288, %s217, [#allocation4], 128, 128, 8
        $region16: #{tpu_custom_call.1} parent=11 // pred_fallthru
          _
        // Predicated region
        $region17: #{tpu_custom_call.1} parent=11 // pred_check
          %p223 = pneg %p85
        $region18: #{tpu_custom_call.1} parent=11 // pred_check_branch
          %225 = sbr.rel (%p223) target = $region20
        $region19: #{tpu_custom_call.1} parent=11 // pred_region
          _
        $region20: #{tpu_custom_call.1} parent=11 // pred_fallthru
          _
        // Predicated region
        $region21: #{tpu_custom_call.1} parent=11 // pred_check
          %p226 = pneg %p106
        $region22: #{tpu_custom_call.1} parent=11 // pred_check_branch
          %228 = sbr.rel (%p226) target = $region24
        $region23: #{tpu_custom_call.1} parent=11 // pred_region
          _
        $region24: #{tpu_custom_call.1} parent=11 // pred_fallthru
          _
        // Predicated region
        $region25: #{tpu_custom_call.1} parent=11 // pred_check
          %p229 = pneg %p127
        $region26: #{tpu_custom_call.1} parent=11 // pred_check_branch
          %231 = sbr.rel (%p229) target = $region28
        $region27: #{tpu_custom_call.1} parent=11 // pred_region
          _
        $region28: #{tpu_custom_call.1} parent=11 // pred_fallthru
          _
        // Predicated region
        $region29: #{tpu_custom_call.1} parent=11 // pred_check
          %p232 = pneg %p148
        $region30: #{tpu_custom_call.1} parent=11 // pred_check_branch
          %234 = sbr.rel (%p232) target = $region32
        $region31: #{tpu_custom_call.1} parent=11 // pred_region
          _
        $region32: #{tpu_custom_call.1} parent=11 // pred_fallthru
          _
        // Predicated region
        $region33: #{tpu_custom_call.1} parent=11 // pred_check
          %p235 = pneg %p169
        $region34: #{tpu_custom_call.1} parent=11 // pred_check_branch
          %237 = sbr.rel (%p235) target = $region36
        $region35: #{tpu_custom_call.1} parent=11 // pred_region
          _
        $region36: #{tpu_custom_call.1} parent=11 // pred_fallthru
          _
      $region12: #{tpu_custom_call.1} parent=5 // pred_fallthru
        _
      %p238 = scmp.lt.s32.totalorder %s17, 2
      // Predicated region
      $region37: #{tpu_custom_call.1} parent=5 // pred_check
        %p239 = pneg %p238
      $region38: #{tpu_custom_call.1} parent=5 // pred_check_branch
        %241 = sbr.rel (%p239) target = $region40
      $region39: #{tpu_custom_call.1} parent=5 // pred_region
        // Predicated region
        $region41: #{tpu_custom_call.1} parent=39 // pred_check
          %p242 = pneg %p37
        $region42: #{tpu_custom_call.1} parent=39 // pred_check_branch
          %244 = sbr.rel (%p242) target = $region44
        $region43: #{tpu_custom_call.1} parent=39 // pred_region
          %p245 = scmp.lt.s32.totalorder %s17, 1
          %s246 = scalar_select %p245, %s17, 1
          %s247 = smul.addr %s246, 2
          %s248 = smul.addr %s247, 8
          %s249 = scalar_lea.vmem %s0, %s248
        $region44: #{tpu_custom_call.1} parent=39 // pred_fallthru
          _
      $region40: #{tpu_custom_call.1} parent=5 // pred_fallthru
        _
      %p250 = scmp.le.s32.totalorder 1, %s17
      %p251 = scmp.lt.s32.totalorder %s17, 3
      %p252 = pnand %p250, %p251
      %p253 = pneg %p252
      // Predicated region
      $region45: #{tpu_custom_call.1} parent=5 // pred_check
        _
      $region46: #{tpu_custom_call.1} parent=5 // pred_check_branch
        %255 = sbr.rel (%p252) target = $region48
      $region47: #{tpu_custom_call.1} parent=5 // pred_region
        %s256 = ssub.s32 %s17, 1
        // Predicated region
        $region49: #{tpu_custom_call.1} parent=47 // pred_check
          %p257 = pneg %p64
        $region50: #{tpu_custom_call.1} parent=47 // pred_check_branch
          %259 = sbr.rel (%p257) target = $region52
        $region51: #{tpu_custom_call.1} parent=47 // pred_region
          %260 = dma.done [#allocation4], 12288
        $region52: #{tpu_custom_call.1} parent=47 // pred_fallthru
          _
        %p261 = scmp.lt.s32.totalorder %s22, 1
        %s262 = scalar_select %p261, %s22, 1
        %s263 = smul.addr %s262, 2
        %s264 = smul.addr %s263, 8
        %s265 = scalar_lea.vmem %s0, %s264
        %p266 = pneg %p43
        %p267 = pneg %p40
        %p268 = pneg %p64
        %p269 = pneg %p61
        %p270 = pneg %p85
        %p271 = pneg %p82
        %p272 = pneg %p106
        %p273 = pneg %p103
        %p274 = pneg %p127
        %p275 = pneg %p124
        %p276 = pneg %p148
        %p277 = pneg %p145
        %p278 = pneg %p169
        %p279 = pneg %p166
        %p280 = pneg %p195
        %p281 = pneg %p192
        %s282 = sand.u32 %s182, 1
        %s283 = scalar_lea.sflag [#allocation5], %s282
        %s284 = sand.u32 %s182, 1
        %s285 = smul.addr %s284, 16
        %s286 = scalar_lea.vmem [#allocation6], %s285
        %p287 = scmp.lt.s32.totalorder %s22, 1
        %s288 = scalar_select %p287, %s22, 1
        %s289 = smul.addr %s288, 2
        %s290 = smul.addr %s289, 8
        %s291 = scalar_lea.vmem %s0, %s290
        %vm293 = vcmask 130048
        %294 = vst.msk [vmem:[#allocation2] sm:$0xff] %vm293, 0.0
        %vm295 = vcmask 261248
        %296 = vst.msk [vmem:[#allocation2 + $0x10] sm:$0xff] %vm295, 0.0
        %v297 = vld [vmem:[%s291] sm:$0xff]
        %v298 = vld [vmem:[%s291 + $0x8] sm:$0xff]
        %v299 = vpack.c.bf16 %v297, %v297
        %v300 = vpack.c.bf16 %v298, %v298
        %v301 = vld [vmem:[%s2] sm:$0xf]
        %v302 = vld [vmem:[%s2 + $0x4] sm:$0xf]
        %v303 = vld [vmem:[%s2 + $0x8] sm:$0xf]
        %v304 = vld [vmem:[%s3] sm:$0xff]
        %v305 = vld [vmem:[%s3 + $0x8] sm:$0xff]
        %v306 = vld [vmem:[%s3 + $0x10] sm:$0xff]
        %308 = vset.pattern.permute.xlu0 0
        %309 = vperm.xlu0 %308, %v304
        %v310 = vpop.permute.xlu0 %309
        %313 = vset.pattern.permute.xlu0 0
        %314 = vperm.xlu0 %313, %v305
        %v315 = vpop.permute.xlu0 %314
        %318 = vset.pattern.permute.xlu0 0
        %319 = vperm.xlu0 %318, %v306
        %v320 = vpop.permute.xlu0 %319
        %v325 = vunpack.c.l.b16 %v301
        %v326 = vunpack.c.l.b16 %v302
        %v327 = vunpack.c.l.b16 %v303
        %v328 = vpack.c.b16 %v326, %v325
        %v329 = vpack.c.b16 %v327, %v327
        %vm330 = vcmask 64512
        %v332 = vsel %vm330, %v328, 0
        %v335 = vsel %vm330, %v329, 0
        %vm337 = vcmask 1043456
        %v339 = vsel %vm337, %v299, 0
        %v342 = vsel %vm337, %v300, 0
        %344 = vmatprep.subr.bf16.mxu0 %v342
        %345 = vmatpush1.bf16.msra.mxu0 %v339
        %346 = vmatprep.subr.bf16.mxu0 0
        %347 = vmatpush1.bf16.msra.mxu0 0
        %348 = vmatprep.subr.bf16.mxu0 0
        %349 = vmatpush1.bf16.msra.mxu0 0
        %350 = vmatprep.subr.bf16.mxu0 0
        %351 = vmatpush1.bf16.msra.mxu0 0
        %352 = vmatprep.subr.bf16.mxu0 0
        %353 = vmatpush1.bf16.msra.mxu0 0
        %354 = vmatprep.subr.bf16.mxu0 0
        %355 = vmatpush1.bf16.msra.mxu0 0
        %356 = vmatprep.subr.bf16.mxu0 0
        %357 = vmatpush1.bf16.msra.mxu0 0
        %358 = vmatprep.subr.bf16.mxu0 0
        %359 = vmatpush1.bf16.msra.mxu0 0
        %360 = vmatprep.subr.bf16.mxu0 0
        %361 = vmatpush1.bf16.msra.mxu0 0
        %362 = vmatprep.subr.bf16.mxu0 0
        %363 = vmatpush1.bf16.msra.mxu0 0
        %364 = vmatprep.subr.bf16.mxu0 0
        %365 = vmatpush1.bf16.msra.mxu0 0
        %366 = vmatprep.subr.bf16.mxu0 0
        %367 = vmatpush1.bf16.msra.mxu0 0
        %368 = vmatprep.subr.bf16.mxu0 0
        %369 = vmatpush1.bf16.msra.mxu0 0
        %370 = vmatprep.subr.bf16.mxu0 0
        %371 = vmatpush1.bf16.msra.mxu0 0
        %372 = vmatprep.subr.bf16.mxu0 0
        %373 = vmatpush1.bf16.msra.mxu0 0
        %374 = vmatprep.subr.bf16.mxu0 0
        %375 = vmatpush1.bf16.msra.mxu0 0
        %376 = vmatprep.mubr.bf16.mxu0 0
        %377 = vmatmul.mubr.bf16.gmra.mrb[0].mxu0 %v332
        %v378 = vpop.f32.mrb[0].mxu0
        %v379 = vadd.f32 %v310, %v378
        %v380 = vpop.f32.mrb[0].mxu0
        %v381 = vadd.f32 %v310, %v380
        %v382 = vpop.f32.mrb[0].mxu0
        %v383 = vadd.f32 %v315, %v382
        %v384 = vpop.f32.mrb[0].mxu0
        %v385 = vadd.f32 %v315, %v384
        %386 = vmatprep.mubr.bf16.mxu0 0
        %387 = vmatmul.mubr.bf16.gmra.mrb[0].mxu0 %v335
        %v388 = vpop.f32.mrb[0].mxu0
        %v389 = vadd.f32 %v320, %v388
        %v390 = vpop.f32.mrb[0].mxu0
        %v391 = vadd.f32 %v320, %v390
        %v392 = vpop.f32.mrb[0].mxu0
        %v393 = vpop.f32.mrb[0].mxu0
        %394 = vdwg.mxu0
        %v395 = vpack.c.bf16 %v383, %v379
        %v396 = vpack.c.bf16 %v385, %v381
        %v397 = vpack.c.bf16 %v389, %v389
        %v398 = vpack.c.bf16 %v391, %v391
        %v399 = vld [vmem:[#allocation3] sm:$0xff]
        %v400 = vld [vmem:[#allocation3 + $0x8] sm:$0xff]
        %v401 = vld [vmem:[#allocation3 + $0x10] sm:$0xff]
        %v402 = vld [vmem:[#allocation3 + $0x18] sm:$0xff]
        %v403 = vld [vmem:[#allocation3 + $0x20] sm:$0xff]
        %v404 = vld [vmem:[#allocation3 + $0x28] sm:$0xff]
        %v405 = vld [vmem:[#allocation3 + $0x30] sm:$0xff]
        %v406 = vld [vmem:[#allocation3 + $0x38] sm:$0xff]
        %v407 = vld [vmem:[#allocation3 + $0x40] sm:$0xff]
        %v408 = vld [vmem:[#allocation3 + $0x48] sm:$0xff]
        %v409 = vld [vmem:[#allocation3 + $0x50] sm:$0xff]
        %v410 = vld [vmem:[#allocation3 + $0x58] sm:$0xff]
        %v411 = vld [vmem:[#allocation3 + $0x60] sm:$0xff]
        %v412 = vld [vmem:[#allocation3 + $0x68] sm:$0xff]
        %v413 = vld [vmem:[#allocation3 + $0x70] sm:$0xff]
        %v414 = vld [vmem:[#allocation3 + $0x78] sm:$0xff]
        %v415 = vld [vmem:[#allocation3 + $0x80] sm:$0xff]
        %v416 = vld [vmem:[#allocation3 + $0x88] sm:$0xff]
        %v417 = vld [vmem:[#allocation3 + $0x90] sm:$0xff]
        %v418 = vld [vmem:[#allocation3 + $0x98] sm:$0xff]
        %v419 = vld [vmem:[#allocation3 + $0xa0] sm:$0xff]
        %v420 = vld [vmem:[#allocation3 + $0xa8] sm:$0xff]
        %v421 = vld [vmem:[#allocation3 + $0xb0] sm:$0xff]
        %v422 = vld [vmem:[#allocation3 + $0xb8] sm:$0xff]
        %v423 = vld [vmem:[#allocation3 + $0xc0] sm:$0xff]
        %v424 = vld [vmem:[#allocation3 + $0xc8] sm:$0xff]
        %v425 = vld [vmem:[#allocation3 + $0xd0] sm:$0xff]
        %v426 = vld [vmem:[#allocation3 + $0xd8] sm:$0xff]
        %v427 = vld [vmem:[#allocation3 + $0xe0] sm:$0xff]
        %v428 = vld [vmem:[#allocation3 + $0xe8] sm:$0xff]
        %v429 = vld [vmem:[#allocation3 + $0xf0] sm:$0xff]
        %v430 = vld [vmem:[#allocation3 + $0xf8] sm:$0xff]
        %s431 = scalar_lea.vmem [#allocation3], 256
        %v432 = vld [vmem:[%s431] sm:$0xff]
        %v433 = vld [vmem:[%s431 + $0x8] sm:$0xff]
        %v434 = vld [vmem:[%s431 + $0x10] sm:$0xff]
        %v435 = vld [vmem:[%s431 + $0x18] sm:$0xff]
        %v436 = vld [vmem:[%s431 + $0x20] sm:$0xff]
        %v437 = vld [vmem:[%s431 + $0x28] sm:$0xff]
        %v438 = vld [vmem:[%s431 + $0x30] sm:$0xff]
        %v439 = vld [vmem:[%s431 + $0x38] sm:$0xff]
        %v440 = vld [vmem:[%s431 + $0x40] sm:$0xff]
        %v441 = vld [vmem:[%s431 + $0x48] sm:$0xff]
        %v442 = vld [vmem:[%s431 + $0x50] sm:$0xff]
        %v443 = vld [vmem:[%s431 + $0x58] sm:$0xff]
        %v444 = vld [vmem:[%s431 + $0x60] sm:$0xff]
        %v445 = vld [vmem:[%s431 + $0x68] sm:$0xff]
        %v446 = vld [vmem:[%s431 + $0x70] sm:$0xff]
        %v447 = vld [vmem:[%s431 + $0x78] sm:$0xff]
        %v448 = vld [vmem:[%s431 + $0x80] sm:$0xff]
        %v449 = vld [vmem:[%s431 + $0x88] sm:$0xff]
        %v450 = vld [vmem:[%s431 + $0x90] sm:$0xff]
        %v451 = vld [vmem:[%s431 + $0x98] sm:$0xff]
        %v452 = vld [vmem:[%s431 + $0xa0] sm:$0xff]
        %v453 = vld [vmem:[%s431 + $0xa8] sm:$0xff]
        %v454 = vld [vmem:[%s431 + $0xb0] sm:$0xff]
        %v455 = vld [vmem:[%s431 + $0xb8] sm:$0xff]
        %v456 = vld [vmem:[%s431 + $0xc0] sm:$0xff]
        %v457 = vld [vmem:[%s431 + $0xc8] sm:$0xff]
        %v458 = vld [vmem:[%s431 + $0xd0] sm:$0xff]
        %v459 = vld [vmem:[%s431 + $0xd8] sm:$0xff]
        %v460 = vld [vmem:[%s431 + $0xe0] sm:$0xff]
        %v461 = vld [vmem:[%s431 + $0xe8] sm:$0xff]
        %v462 = vld [vmem:[%s431 + $0xf0] sm:$0xff]
        %v463 = vld [vmem:[%s431 + $0xf8] sm:$0xff]
        %v466 = vrot.slane %v395, 4
        %v467 = vrot.slane %v396, 4
        %v502 = vunpack.c.l.b16 %v432
        %v503 = vunpack.c.h.b16 %v432
        %v504 = vunpack.c.l.b16 %v433
        %v505 = vunpack.c.h.b16 %v433
        %v506 = vunpack.c.l.b16 %v434
        %v507 = vunpack.c.h.b16 %v434
        %v508 = vunpack.c.l.b16 %v435
        %v509 = vunpack.c.h.b16 %v435
        %v510 = vunpack.c.l.b16 %v436
        %v511 = vunpack.c.h.b16 %v436
        %v512 = vunpack.c.l.b16 %v437
        %v513 = vunpack.c.h.b16 %v437
        %v514 = vunpack.c.l.b16 %v438
        %v515 = vunpack.c.h.b16 %v438
        %v516 = vunpack.c.l.b16 %v439
        %v517 = vunpack.c.h.b16 %v439
        %v518 = vunpack.c.l.b16 %v440
        %v519 = vunpack.c.h.b16 %v440
        %v520 = vunpack.c.l.b16 %v441
        %v521 = vunpack.c.h.b16 %v441
        %v522 = vunpack.c.l.b16 %v442
        %v523 = vunpack.c.h.b16 %v442
        %v524 = vunpack.c.l.b16 %v443
        %v525 = vunpack.c.h.b16 %v443
        %v526 = vunpack.c.l.b16 %v444
        %v527 = vunpack.c.h.b16 %v444
        %v528 = vunpack.c.l.b16 %v445
        %v529 = vunpack.c.h.b16 %v445
        %v530 = vunpack.c.l.b16 %v446
        %v531 = vunpack.c.h.b16 %v446
        %v532 = vunpack.c.l.b16 %v447
        %v533 = vunpack.c.h.b16 %v447
        %v534 = vunpack.c.l.b16 %v448
        %v535 = vunpack.c.h.b16 %v448
        %v536 = vunpack.c.l.b16 %v449
        %v537 = vunpack.c.h.b16 %v449
        %v538 = vunpack.c.l.b16 %v450
        %v539 = vunpack.c.h.b16 %v450
        %v540 = vunpack.c.l.b16 %v451
        %v541 = vunpack.c.h.b16 %v451
        %v542 = vunpack.c.l.b16 %v452
        %v543 = vunpack.c.h.b16 %v452
        %v544 = vunpack.c.l.b16 %v453
        %v545 = vunpack.c.h.b16 %v453
        %v546 = vunpack.c.l.b16 %v454
        %v547 = vunpack.c.h.b16 %v454
        %v548 = vunpack.c.l.b16 %v455
        %v549 = vunpack.c.h.b16 %v455
        %v550 = vunpack.c.l.b16 %v456
        %v551 = vunpack.c.h.b16 %v456
        %v552 = vunpack.c.l.b16 %v457
        %v553 = vunpack.c.h.b16 %v457
        %v554 = vunpack.c.l.b16 %v458
        %v555 = vunpack.c.h.b16 %v458
        %v556 = vunpack.c.l.b16 %v459
        %v557 = vunpack.c.h.b16 %v459
        %v558 = vunpack.c.l.b16 %v460
        %v559 = vunpack.c.h.b16 %v460
        %v560 = vunpack.c.l.b16 %v461
        %v561 = vunpack.c.h.b16 %v461
        %v562 = vunpack.c.l.b16 %v462
        %v563 = vunpack.c.h.b16 %v462
        %v564 = vunpack.c.l.b16 %v463
        %v565 = vunpack.c.h.b16 %v463
        %v566 = vpack.c.b16 %v504, %v502
        %v567 = vpack.c.b16 %v505, %v503
        %v568 = vpack.c.b16 %v508, %v506
        %v569 = vpack.c.b16 %v509, %v507
        %v570 = vpack.c.b16 %v512, %v510
        %v571 = vpack.c.b16 %v513, %v511
        %v572 = vpack.c.b16 %v516, %v514
        %v573 = vpack.c.b16 %v517, %v515
        %v574 = vpack.c.b16 %v520, %v518
        %v575 = vpack.c.b16 %v521, %v519
        %v576 = vpack.c.b16 %v524, %v522
        %v577 = vpack.c.b16 %v525, %v523
        %v578 = vpack.c.b16 %v528, %v526
        %v579 = vpack.c.b16 %v529, %v527
        %v580 = vpack.c.b16 %v532, %v530
        %v581 = vpack.c.b16 %v533, %v531
        %v582 = vpack.c.b16 %v536, %v534
        %v583 = vpack.c.b16 %v537, %v535
        %v584 = vpack.c.b16 %v540, %v538
        %v585 = vpack.c.b16 %v541, %v539
        %v586 = vpack.c.b16 %v544, %v542
        %v587 = vpack.c.b16 %v545, %v543
        %v588 = vpack.c.b16 %v548, %v546
        %v589 = vpack.c.b16 %v549, %v547
        %v590 = vpack.c.b16 %v552, %v550
        %v591 = vpack.c.b16 %v553, %v551
        %v592 = vpack.c.b16 %v556, %v554
        %v593 = vpack.c.b16 %v557, %v555
        %v594 = vpack.c.b16 %v560, %v558
        %v595 = vpack.c.b16 %v561, %v559
        %v596 = vpack.c.b16 %v564, %v562
        %v597 = vpack.c.b16 %v565, %v563
        %630 = vmatprep.subr.bf16.mxu0 %v567
        %631 = vmatpush1.bf16.msra.mxu0 %v566
        %632 = vmatprep.subr.bf16.mxu0 %v569
        %633 = vmatpush1.bf16.msra.mxu0 %v568
        %634 = vmatprep.subr.bf16.mxu0 %v571
        %635 = vmatpush1.bf16.msra.mxu0 %v570
        %636 = vmatprep.subr.bf16.mxu0 %v573
        %637 = vmatpush1.bf16.msra.mxu0 %v572
        %638 = vmatprep.subr.bf16.mxu0 %v575
        %639 = vmatpush1.bf16.msra.mxu0 %v574
        %640 = vmatprep.subr.bf16.mxu0 %v577
        %641 = vmatpush1.bf16.msra.mxu0 %v576
        %642 = vmatprep.subr.bf16.mxu0 %v579
        %643 = vmatpush1.bf16.msra.mxu0 %v578
        %644 = vmatprep.subr.bf16.mxu0 %v581
        %645 = vmatpush1.bf16.msra.mxu0 %v580
        %646 = vmatprep.subr.bf16.mxu0 %v583
        %647 = vmatpush1.bf16.msra.mxu0 %v582
        %648 = vmatprep.subr.bf16.mxu0 %v585
        %649 = vmatpush1.bf16.msra.mxu0 %v584
        %650 = vmatprep.subr.bf16.mxu0 %v587
        %651 = vmatpush1.bf16.msra.mxu0 %v586
        %652 = vmatprep.subr.bf16.mxu0 %v589
        %653 = vmatpush1.bf16.msra.mxu0 %v588
        %654 = vmatprep.subr.bf16.mxu0 %v591
        %655 = vmatpush1.bf16.msra.mxu0 %v590
        %656 = vmatprep.subr.bf16.mxu0 %v593
        %657 = vmatpush1.bf16.msra.mxu0 %v592
        %658 = vmatprep.subr.bf16.mxu0 %v595
        %659 = vmatpush1.bf16.msra.mxu0 %v594
        %660 = vmatprep.subr.bf16.mxu0 %v597
        %661 = vmatpush1.bf16.msra.mxu0 %v596
        %662 = vmatprep.mubr.bf16.mxu0 %v467
        %663 = vmatmul.mubr.bf16.gmra.mrb[0].mxu0 %v466
        %v664 = vpop.f32.mrb[0].mxu0
        %v665 = vadd.f32 0.0, %v664
        %v666 = vpop.f32.mrb[0].mxu0
        %v667 = vadd.f32 0.0, %v666
        %v668 = vpop.f32.mrb[0].mxu0
        %v669 = vpop.f32.mrb[0].mxu0
        %670 = vdwg.mxu0
        %v703 = vunpack.c.l.b16 %v399
        %v704 = vunpack.c.h.b16 %v399
        %v705 = vunpack.c.l.b16 %v400
        %v706 = vunpack.c.h.b16 %v400
        %v707 = vunpack.c.l.b16 %v401
        %v708 = vunpack.c.h.b16 %v401
        %v709 = vunpack.c.l.b16 %v402
        %v710 = vunpack.c.h.b16 %v402
        %v711 = vunpack.c.l.b16 %v403
        %v712 = vunpack.c.h.b16 %v403
        %v713 = vunpack.c.l.b16 %v404
        %v714 = vunpack.c.h.b16 %v404
        %v715 = vunpack.c.l.b16 %v405
        %v716 = vunpack.c.h.b16 %v405
        %v717 = vunpack.c.l.b16 %v406
        %v718 = vunpack.c.h.b16 %v406
        %v719 = vunpack.c.l.b16 %v407
        %v720 = vunpack.c.h.b16 %v407
        %v721 = vunpack.c.l.b16 %v408
        %v722 = vunpack.c.h.b16 %v408
        %v723 = vunpack.c.l.b16 %v409
        %v724 = vunpack.c.h.b16 %v409
        %v725 = vunpack.c.l.b16 %v410
        %v726 = vunpack.c.h.b16 %v410
        %v727 = vunpack.c.l.b16 %v411
        %v728 = vunpack.c.h.b16 %v411
        %v729 = vunpack.c.l.b16 %v412
        %v730 = vunpack.c.h.b16 %v412
        %v731 = vunpack.c.l.b16 %v413
        %v732 = vunpack.c.h.b16 %v413
        %v733 = vunpack.c.l.b16 %v414
        %v734 = vunpack.c.h.b16 %v414
        %v735 = vunpack.c.l.b16 %v415
        %v736 = vunpack.c.h.b16 %v415
        %v737 = vunpack.c.l.b16 %v416
        %v738 = vunpack.c.h.b16 %v416
        %v739 = vunpack.c.l.b16 %v417
        %v740 = vunpack.c.h.b16 %v417
        %v741 = vunpack.c.l.b16 %v418
        %v742 = vunpack.c.h.b16 %v418
        %v743 = vunpack.c.l.b16 %v419
        %v744 = vunpack.c.h.b16 %v419
        %v745 = vunpack.c.l.b16 %v420
        %v746 = vunpack.c.h.b16 %v420
        %v747 = vunpack.c.l.b16 %v421
        %v748 = vunpack.c.h.b16 %v421
        %v749 = vunpack.c.l.b16 %v422
        %v750 = vunpack.c.h.b16 %v422
        %v751 = vunpack.c.l.b16 %v423
        %v752 = vunpack.c.h.b16 %v423
        %v753 = vunpack.c.l.b16 %v424
        %v754 = vunpack.c.h.b16 %v424
        %v755 = vunpack.c.l.b16 %v425
        %v756 = vunpack.c.h.b16 %v425
        %v757 = vunpack.c.l.b16 %v426
        %v758 = vunpack.c.h.b16 %v426
        %v759 = vunpack.c.l.b16 %v427
        %v760 = vunpack.c.h.b16 %v427
        %v761 = vunpack.c.l.b16 %v428
        %v762 = vunpack.c.h.b16 %v428
        %v763 = vunpack.c.l.b16 %v429
        %v764 = vunpack.c.h.b16 %v429
        %v765 = vunpack.c.l.b16 %v430
        %v766 = vunpack.c.h.b16 %v430
        %v767 = vpack.c.b16 %v705, %v703
        %v768 = vpack.c.b16 %v706, %v704
        %v769 = vpack.c.b16 %v709, %v707
        %v770 = vpack.c.b16 %v710, %v708
        %v771 = vpack.c.b16 %v713, %v711
        %v772 = vpack.c.b16 %v714, %v712
        %v773 = vpack.c.b16 %v717, %v715
        %v774 = vpack.c.b16 %v718, %v716
        %v775 = vpack.c.b16 %v721, %v719
        %v776 = vpack.c.b16 %v722, %v720
        %v777 = vpack.c.b16 %v725, %v723
        %v778 = vpack.c.b16 %v726, %v724
        %v779 = vpack.c.b16 %v729, %v727
        %v780 = vpack.c.b16 %v730, %v728
        %v781 = vpack.c.b16 %v733, %v731
        %v782 = vpack.c.b16 %v734, %v732
        %v783 = vpack.c.b16 %v737, %v735
        %v784 = vpack.c.b16 %v738, %v736
        %v785 = vpack.c.b16 %v741, %v739
        %v786 = vpack.c.b16 %v742, %v740
        %v787 = vpack.c.b16 %v745, %v743
        %v788 = vpack.c.b16 %v746, %v744
        %v789 = vpack.c.b16 %v749, %v747
        %v790 = vpack.c.b16 %v750, %v748
        %v791 = vpack.c.b16 %v753, %v751
        %v792 = vpack.c.b16 %v754, %v752
        %v793 = vpack.c.b16 %v757, %v755
        %v794 = vpack.c.b16 %v758, %v756
        %v795 = vpack.c.b16 %v761, %v759
        %v796 = vpack.c.b16 %v762, %v760
        %v797 = vpack.c.b16 %v765, %v763
        %v798 = vpack.c.b16 %v766, %v764
        %831 = vmatprep.subr.bf16.mxu0 %v768
        %832 = vmatpush1.bf16.msra.mxu0 %v767
        %833 = vmatprep.subr.bf16.mxu0 %v770
        %834 = vmatpush1.bf16.msra.mxu0 %v769
        %835 = vmatprep.subr.bf16.mxu0 %v772
        %836 = vmatpush1.bf16.msra.mxu0 %v771
        %837 = vmatprep.subr.bf16.mxu0 %v774
        %838 = vmatpush1.bf16.msra.mxu0 %v773
        %839 = vmatprep.subr.bf16.mxu0 %v776
        %840 = vmatpush1.bf16.msra.mxu0 %v775
        %841 = vmatprep.subr.bf16.mxu0 %v778
        %842 = vmatpush1.bf16.msra.mxu0 %v777
        %843 = vmatprep.subr.bf16.mxu0 %v780
        %844 = vmatpush1.bf16.msra.mxu0 %v779
        %845 = vmatprep.subr.bf16.mxu0 %v782
        %846 = vmatpush1.bf16.msra.mxu0 %v781
        %847 = vmatprep.subr.bf16.mxu0 %v784
        %848 = vmatpush1.bf16.msra.mxu0 %v783
        %849 = vmatprep.subr.bf16.mxu0 %v786
        %850 = vmatpush1.bf16.msra.mxu0 %v785
        %851 = vmatprep.subr.bf16.mxu0 %v788
        %852 = vmatpush1.bf16.msra.mxu0 %v787
        %853 = vmatprep.subr.bf16.mxu0 %v790
        %854 = vmatpush1.bf16.msra.mxu0 %v789
        %855 = vmatprep.subr.bf16.mxu0 %v792
        %856 = vmatpush1.bf16.msra.mxu0 %v791
        %857 = vmatprep.subr.bf16.mxu0 %v794
        %858 = vmatpush1.bf16.msra.mxu0 %v793
        %859 = vmatprep.subr.bf16.mxu0 %v796
        %860 = vmatpush1.bf16.msra.mxu0 %v795
        %861 = vmatprep.subr.bf16.mxu0 %v798
        %862 = vmatpush1.bf16.msra.mxu0 %v797
        %863 = vmatprep.mubr.bf16.mxu0 %v396
        %864 = vmatmul.mubr.bf16.gmra.mrb[0].mxu0 %v395
        %v865 = vpop.f32.mrb[0].mxu0
        %v866 = vadd.f32 %v665, %v865
        %v867 = vpop.f32.mrb[0].mxu0
        %v868 = vadd.f32 %v667, %v867
        %v869 = vpop.f32.mrb[0].mxu0
        %v870 = vpop.f32.mrb[0].mxu0
        %871 = vdwg.mxu0
        %s872 = scalar_lea.vmem [#allocation3], 512
        %v873 = vld [vmem:[%s872] sm:$0xff]
        %v874 = vld [vmem:[%s872 + $0x8] sm:$0xff]
        %v875 = vld [vmem:[%s872 + $0x10] sm:$0xff]
        %v876 = vld [vmem:[%s872 + $0x18] sm:$0xff]
        %v877 = vld [vmem:[%s872 + $0x20] sm:$0xff]
        %v878 = vld [vmem:[%s872 + $0x28] sm:$0xff]
        %v879 = vld [vmem:[%s872 + $0x30] sm:$0xff]
        %v880 = vld [vmem:[%s872 + $0x38] sm:$0xff]
        %v881 = vld [vmem:[%s872 + $0x40] sm:$0xff]
        %v882 = vld [vmem:[%s872 + $0x48] sm:$0xff]
        %v883 = vld [vmem:[%s872 + $0x50] sm:$0xff]
        %v884 = vld [vmem:[%s872 + $0x58] sm:$0xff]
        %v885 = vld [vmem:[%s872 + $0x60] sm:$0xff]
        %v886 = vld [vmem:[%s872 + $0x68] sm:$0xff]
        %v887 = vld [vmem:[%s872 + $0x70] sm:$0xff]
        %v888 = vld [vmem:[%s872 + $0x78] sm:$0xff]
        %v889 = vld [vmem:[%s872 + $0x80] sm:$0xff]
        %v890 = vld [vmem:[%s872 + $0x88] sm:$0xff]
        %v891 = vld [vmem:[%s872 + $0x90] sm:$0xff]
        %v892 = vld [vmem:[%s872 + $0x98] sm:$0xff]
        %v893 = vld [vmem:[%s872 + $0xa0] sm:$0xff]
        %v894 = vld [vmem:[%s872 + $0xa8] sm:$0xff]
        %v895 = vld [vmem:[%s872 + $0xb0] sm:$0xff]
        %v896 = vld [vmem:[%s872 + $0xb8] sm:$0xff]
        %v897 = vld [vmem:[%s872 + $0xc0] sm:$0xff]
        %v898 = vld [vmem:[%s872 + $0xc8] sm:$0xff]
        %v899 = vld [vmem:[%s872 + $0xd0] sm:$0xff]
        %v900 = vld [vmem:[%s872 + $0xd8] sm:$0xff]
        %v901 = vld [vmem:[%s872 + $0xe0] sm:$0xff]
        %v902 = vld [vmem:[%s872 + $0xe8] sm:$0xff]
        %v903 = vld [vmem:[%s872 + $0xf0] sm:$0xff]
        %v904 = vld [vmem:[%s872 + $0xf8] sm:$0xff]
        %v937 = vunpack.c.l.b16 %v873
        %v938 = vunpack.c.h.b16 %v873
        %v939 = vunpack.c.l.b16 %v874
        %v940 = vunpack.c.h.b16 %v874
        %v941 = vunpack.c.l.b16 %v875
        %v942 = vunpack.c.h.b16 %v875
        %v943 = vunpack.c.l.b16 %v876
        %v944 = vunpack.c.h.b16 %v876
        %v945 = vunpack.c.l.b16 %v877
        %v946 = vunpack.c.h.b16 %v877
        %v947 = vunpack.c.l.b16 %v878
        %v948 = vunpack.c.h.b16 %v878
        %v949 = vunpack.c.l.b16 %v879
        %v950 = vunpack.c.h.b16 %v879
        %v951 = vunpack.c.l.b16 %v880
        %v952 = vunpack.c.h.b16 %v880
        %v953 = vunpack.c.l.b16 %v881
        %v954 = vunpack.c.h.b16 %v881
        %v955 = vunpack.c.l.b16 %v882
        %v956 = vunpack.c.h.b16 %v882
        %v957 = vunpack.c.l.b16 %v883
        %v958 = vunpack.c.h.b16 %v883
        %v959 = vunpack.c.l.b16 %v884
        %v960 = vunpack.c.h.b16 %v884
        %v961 = vunpack.c.l.b16 %v885
        %v962 = vunpack.c.h.b16 %v885
        %v963 = vunpack.c.l.b16 %v886
        %v964 = vunpack.c.h.b16 %v886
        %v965 = vunpack.c.l.b16 %v887
        %v966 = vunpack.c.h.b16 %v887
        %v967 = vunpack.c.l.b16 %v888
        %v968 = vunpack.c.h.b16 %v888
        %v969 = vunpack.c.l.b16 %v889
        %v970 = vunpack.c.h.b16 %v889
        %v971 = vunpack.c.l.b16 %v890
        %v972 = vunpack.c.h.b16 %v890
        %v973 = vunpack.c.l.b16 %v891
        %v974 = vunpack.c.h.b16 %v891
        %v975 = vunpack.c.l.b16 %v892
        %v976 = vunpack.c.h.b16 %v892
        %v977 = vunpack.c.l.b16 %v893
        %v978 = vunpack.c.h.b16 %v893
        %v979 = vunpack.c.l.b16 %v894
        %v980 = vunpack.c.h.b16 %v894
        %v981 = vunpack.c.l.b16 %v895
        %v982 = vunpack.c.h.b16 %v895
        %v983 = vunpack.c.l.b16 %v896
        %v984 = vunpack.c.h.b16 %v896
        %v985 = vunpack.c.l.b16 %v897
        %v986 = vunpack.c.h.b16 %v897
        %v987 = vunpack.c.l.b16 %v898
        %v988 = vunpack.c.h.b16 %v898
        %v989 = vunpack.c.l.b16 %v899
        %v990 = vunpack.c.h.b16 %v899
        %v991 = vunpack.c.l.b16 %v900
        %v992 = vunpack.c.h.b16 %v900
        %v993 = vunpack.c.l.b16 %v901
        %v994 = vunpack.c.h.b16 %v901
        %v995 = vunpack.c.l.b16 %v902
        %v996 = vunpack.c.h.b16 %v902
        %v997 = vunpack.c.l.b16 %v903
        %v998 = vunpack.c.h.b16 %v903
        %v999 = vunpack.c.l.b16 %v904
        %v1000 = vunpack.c.h.b16 %v904
        %v1001 = vpack.c.b16 %v939, %v937
        %v1002 = vpack.c.b16 %v940, %v938
        %v1003 = vpack.c.b16 %v943, %v941
        %v1004 = vpack.c.b16 %v944, %v942
        %v1005 = vpack.c.b16 %v947, %v945
        %v1006 = vpack.c.b16 %v948, %v946
        %v1007 = vpack.c.b16 %v951, %v949
        %v1008 = vpack.c.b16 %v952, %v950
        %v1009 = vpack.c.b16 %v955, %v953
        %v1010 = vpack.c.b16 %v956, %v954
        %v1011 = vpack.c.b16 %v959, %v957
        %v1012 = vpack.c.b16 %v960, %v958
        %v1013 = vpack.c.b16 %v963, %v961
        %v1014 = vpack.c.b16 %v964, %v962
        %v1015 = vpack.c.b16 %v967, %v965
        %v1016 = vpack.c.b16 %v968, %v966
        %v1017 = vpack.c.b16 %v971, %v969
        %v1018 = vpack.c.b16 %v972, %v970
        %v1019 = vpack.c.b16 %v975, %v973
        %v1020 = vpack.c.b16 %v976, %v974
        %v1021 = vpack.c.b16 %v979, %v977
        %v1022 = vpack.c.b16 %v980, %v978
        %v1023 = vpack.c.b16 %v983, %v981
        %v1024 = vpack.c.b16 %v984, %v982
        %v1025 = vpack.c.b16 %v987, %v985
        %v1026 = vpack.c.b16 %v988, %v986
        %v1027 = vpack.c.b16 %v991, %v989
        %v1028 = vpack.c.b16 %v992, %v990
        %v1029 = vpack.c.b16 %v995, %v993
        %v1030 = vpack.c.b16 %v996, %v994
        %v1031 = vpack.c.b16 %v999, %v997
        %v1032 = vpack.c.b16 %v1000, %v998
        %1065 = vmatprep.subr.bf16.mxu0 %v1002
        %1066 = vmatpush1.bf16.msra.mxu0 %v1001
        %1067 = vmatprep.subr.bf16.mxu0 %v1004
        %1068 = vmatpush1.bf16.msra.mxu0 %v1003
        %1069 = vmatprep.subr.bf16.mxu0 %v1006
        %1070 = vmatpush1.bf16.msra.mxu0 %v1005
        %1071 = vmatprep.subr.bf16.mxu0 %v1008
        %1072 = vmatpush1.bf16.msra.mxu0 %v1007
        %1073 = vmatprep.subr.bf16.mxu0 %v1010
        %1074 = vmatpush1.bf16.msra.mxu0 %v1009
        %1075 = vmatprep.subr.bf16.mxu0 %v1012
        %1076 = vmatpush1.bf16.msra.mxu0 %v1011
        %1077 = vmatprep.subr.bf16.mxu0 %v1014
        %1078 = vmatpush1.bf16.msra.mxu0 %v1013
        %1079 = vmatprep.subr.bf16.mxu0 %v1016
        %1080 = vmatpush1.bf16.msra.mxu0 %v1015
        %1081 = vmatprep.subr.bf16.mxu0 %v1018
        %1082 = vmatpush1.bf16.msra.mxu0 %v1017
        %1083 = vmatprep.subr.bf16.mxu0 %v1020
        %1084 = vmatpush1.bf16.msra.mxu0 %v1019
        %1085 = vmatprep.subr.bf16.mxu0 %v1022
        %1086 = vmatpush1.bf16.msra.mxu0 %v1021
        %1087 = vmatprep.subr.bf16.mxu0 %v1024
        %1088 = vmatpush1.bf16.msra.mxu0 %v1023
        %1089 = vmatprep.subr.bf16.mxu0 %v1026
        %1090 = vmatpush1.bf16.msra.mxu0 %v1025
        %1091 = vmatprep.subr.bf16.mxu0 %v1028
        %1092 = vmatpush1.bf16.msra.mxu0 %v1027
        %1093 = vmatprep.subr.bf16.mxu0 %v1030
        %1094 = vmatpush1.bf16.msra.mxu0 %v1029
        %1095 = vmatprep.subr.bf16.mxu0 %v1032
        %1096 = vmatpush1.bf16.msra.mxu0 %v1031
        %1097 = vmatprep.mubr.bf16.mxu0 %v398
        %1098 = vmatmul.mubr.bf16.gmra.mrb[0].mxu0 %v397
        %v1099 = vpop.f32.mrb[0].mxu0
        %v1100 = vadd.f32 0.0, %v1099
        %v1101 = vpop.f32.mrb[0].mxu0
        %v1102 = vadd.f32 0.0, %v1101
        %v1103 = vpop.f32.mrb[0].mxu0
        %v1104 = vpop.f32.mrb[0].mxu0
        %1105 = vdwg.mxu0
        %v1106 = vadd.f32 %v866, %v1100
        %v1107 = vadd.f32 %v868, %v1102
        %v1108 = vld [vmem:[%s4] sm:$0xff]
        %1110 = vset.pattern.permute.xlu0 0
        %1111 = vperm.xlu0 %1110, %v1108
        %v1112 = vpop.permute.xlu0 %1111
        %v1114 = vadd.f32 %v1106, %v1112
        %v1115 = vadd.f32 %v1107, %v1112
        %v1116 = vmax.f32 %v1114, 0.0
        %v1117 = vmax.f32 %v1115, 0.0
        %1120 = vrot.lane.b32.xlu0 %v1116, 16
        %v1121 = vpop.permute.xlu0 %1120
        %1122 = vrot.lane.b32.xlu0 %v1117, 16
        %v1123 = vpop.permute.xlu0 %1122
        %v1124 = vsel %vm293, %v1121, %v1123
        %vm1128 = vcmask 1047680
        %1129 = vst.msk [vmem:[#allocation2] sm:$0xff] %vm1128, %v1121
        %1130 = vst [vmem:[#allocation2 + $0x8] sm:$0xff] %v1124
        %1131 = vst.msk [vmem:[#allocation2 + $0x10] sm:$0xff] %vm293, %v1123
        %v1132 = vld [vmem:[%s5] sm:$0xf]
        %v1133 = vld [vmem:[#allocation2] sm:$0xff]
        %v1134 = vld [vmem:[#allocation2 + $0x8] sm:$0xff]
        %v1135 = vpack.c.bf16 %v1133, %v1133
        %v1136 = vpack.c.bf16 %v1134, %v1134
        %s1137 = scalar_lea.vmem %s5, 4
        %v1138 = vld [vmem:[%s1137] sm:$0xf]
        %v1139 = vld [vmem:[#allocation2 + $0x10] sm:$0xff]
        %v1140 = vpack.c.bf16 %v1139, %v1139
        %1144 = vrot.lane.b32.xlu0 %v1135, 112
        %v1145 = vpop.permute.xlu0 %1144
        %1146 = vrot.lane.b32.xlu0 %v1136, 112
        %v1147 = vpop.permute.xlu0 %1146
        %1148 = vrot.lane.b32.xlu0 %v1140, 112
        %v1149 = vpop.permute.xlu0 %1148
        %vm1150 = vcmask 916480
        %v1151 = vsel %vm1150, %v1145, %v1147
        %v1152 = vsel %vm1150, %v1147, %v1149
        %v1154 = vsel %vm330, %v1138, 0
        %v1157 = vsel %vm337, %v1151, 0
        %v1160 = vsel %vm337, %v1152, 0
        %1162 = vmatprep.subr.bf16.mxu0 %v1160
        %1163 = vmatpush1.bf16.msra.mxu0 %v1157
        %1164 = vmatprep.subr.bf16.mxu0 0
        %1165 = vmatpush1.bf16.msra.mxu0 0
        %1166 = vmatprep.subr.bf16.mxu0 0
        %1167 = vmatpush1.bf16.msra.mxu0 0
        %1168 = vmatprep.subr.bf16.mxu0 0
        %1169 = vmatpush1.bf16.msra.mxu0 0
        %1170 = vmatprep.subr.bf16.mxu0 0
        %1171 = vmatpush1.bf16.msra.mxu0 0
        %1172 = vmatprep.subr.bf16.mxu0 0
        %1173 = vmatpush1.bf16.msra.mxu0 0
        %1174 = vmatprep.subr.bf16.mxu0 0
        %1175 = vmatpush1.bf16.msra.mxu0 0
        %1176 = vmatprep.subr.bf16.mxu0 0
        %1177 = vmatpush1.bf16.msra.mxu0 0
        %1178 = vmatprep.subr.bf16.mxu0 0
        %1179 = vmatpush1.bf16.msra.mxu0 0
        %1180 = vmatprep.subr.bf16.mxu0 0
        %1181 = vmatpush1.bf16.msra.mxu0 0
        %1182 = vmatprep.subr.bf16.mxu0 0
        %1183 = vmatpush1.bf16.msra.mxu0 0
        %1184 = vmatprep.subr.bf16.mxu0 0
        %1185 = vmatpush1.bf16.msra.mxu0 0
        %1186 = vmatprep.subr.bf16.mxu0 0
        %1187 = vmatpush1.bf16.msra.mxu0 0
        %1188 = vmatprep.subr.bf16.mxu0 0
        %1189 = vmatpush1.bf16.msra.mxu0 0
        %1190 = vmatprep.subr.bf16.mxu0 0
        %1191 = vmatpush1.bf16.msra.mxu0 0
        %1192 = vmatprep.subr.bf16.mxu0 0
        %1193 = vmatpush1.bf16.msra.mxu0 0
        %1194 = vmatprep.mubr.bf16.mxu0 0
        %1195 = vmatmul.mubr.bf16.gmra.mrb[0].mxu0 %v1154
        %v1196 = vpop.f32.mrb[0].mxu0
        %v1197 = vadd.f32 0.0, %v1196
        %v1198 = vpop.f32.mrb[0].mxu0
        %v1199 = vadd.f32 0.0, %v1198
        %v1200 = vpop.f32.mrb[0].mxu0
        %v1201 = vpop.f32.mrb[0].mxu0
        %1202 = vdwg.mxu0
        %v1204 = vsel %vm330, %v1132, 0
        %v1207 = vsel %vm337, %v1135, 0
        %v1210 = vsel %vm337, %v1136, 0
        %1212 = vmatprep.subr.bf16.mxu0 %v1210
        %1213 = vmatpush1.bf16.msra.mxu0 %v1207
        %1214 = vmatprep.subr.bf16.mxu0 0
        %1215 = vmatpush1.bf16.msra.mxu0 0
        %1216 = vmatprep.subr.bf16.mxu0 0
        %1217 = vmatpush1.bf16.msra.mxu0 0
        %1218 = vmatprep.subr.bf16.mxu0 0
        %1219 = vmatpush1.bf16.msra.mxu0 0
        %1220 = vmatprep.subr.bf16.mxu0 0
        %1221 = vmatpush1.bf16.msra.mxu0 0
        %1222 = vmatprep.subr.bf16.mxu0 0
        %1223 = vmatpush1.bf16.msra.mxu0 0
        %1224 = vmatprep.subr.bf16.mxu0 0
        %1225 = vmatpush1.bf16.msra.mxu0 0
        %1226 = vmatprep.subr.bf16.mxu0 0
        %1227 = vmatpush1.bf16.msra.mxu0 0
        %1228 = vmatprep.subr.bf16.mxu0 0
        %1229 = vmatpush1.bf16.msra.mxu0 0
        %1230 = vmatprep.subr.bf16.mxu0 0
        %1231 = vmatpush1.bf16.msra.mxu0 0
        %1232 = vmatprep.subr.bf16.mxu0 0
        %1233 = vmatpush1.bf16.msra.mxu0 0
        %1234 = vmatprep.subr.bf16.mxu0 0
        %1235 = vmatpush1.bf16.msra.mxu0 0
        %1236 = vmatprep.subr.bf16.mxu0 0
        %1237 = vmatpush1.bf16.msra.mxu0 0
        %1238 = vmatprep.subr.bf16.mxu0 0
        %1239 = vmatpush1.bf16.msra.mxu0 0
        %1240 = vmatprep.subr.bf16.mxu0 0
        %1241 = vmatpush1.bf16.msra.mxu0 0
        %1242 = vmatprep.subr.bf16.mxu0 0
        %1243 = vmatpush1.bf16.msra.mxu0 0
        %1244 = vmatprep.mubr.bf16.mxu0 0
        %1245 = vmatmul.mubr.bf16.gmra.mrb[0].mxu0 %v1204
        %v1246 = vpop.f32.mrb[0].mxu0
        %v1247 = vadd.f32 %v1197, %v1246
        %v1248 = vpop.f32.mrb[0].mxu0
        %v1249 = vadd.f32 %v1199, %v1248
        %v1250 = vpop.f32.mrb[0].mxu0
        %v1251 = vpop.f32.mrb[0].mxu0
        %1252 = vdwg.mxu0
        %s1253 = scalar_lea.vmem %s5, 8
        %v1254 = vld [vmem:[%s1253] sm:$0xf]
        %1255 = vrot.lane.b32.xlu0 %v1135, 96
        %v1256 = vpop.permute.xlu0 %1255
        %1257 = vrot.lane.b32.xlu0 %v1136, 96
        %v1258 = vpop.permute.xlu0 %1257
        %1259 = vrot.lane.b32.xlu0 %v1140, 96
        %v1260 = vpop.permute.xlu0 %1259
        %vm1261 = vcmask 785408
        %v1262 = vsel %vm1261, %v1256, %v1258
        %v1263 = vsel %vm1261, %v1258, %v1260
        %v1265 = vsel %vm330, %v1254, 0
        %v1268 = vsel %vm337, %v1262, 0
        %v1271 = vsel %vm337, %v1263, 0
        %1273 = vmatprep.subr.bf16.mxu0 %v1271
        %1274 = vmatpush1.bf16.msra.mxu0 %v1268
        %1275 = vmatprep.subr.bf16.mxu0 0
        %1276 = vmatpush1.bf16.msra.mxu0 0
        %1277 = vmatprep.subr.bf16.mxu0 0
        %1278 = vmatpush1.bf16.msra.mxu0 0
        %1279 = vmatprep.subr.bf16.mxu0 0
        %1280 = vmatpush1.bf16.msra.mxu0 0
        %1281 = vmatprep.subr.bf16.mxu0 0
        %1282 = vmatpush1.bf16.msra.mxu0 0
        %1283 = vmatprep.subr.bf16.mxu0 0
        %1284 = vmatpush1.bf16.msra.mxu0 0
        %1285 = vmatprep.subr.bf16.mxu0 0
        %1286 = vmatpush1.bf16.msra.mxu0 0
        %1287 = vmatprep.subr.bf16.mxu0 0
        %1288 = vmatpush1.bf16.msra.mxu0 0
        %1289 = vmatprep.subr.bf16.mxu0 0
        %1290 = vmatpush1.bf16.msra.mxu0 0
        %1291 = vmatprep.subr.bf16.mxu0 0
        %1292 = vmatpush1.bf16.msra.mxu0 0
        %1293 = vmatprep.subr.bf16.mxu0 0
        %1294 = vmatpush1.bf16.msra.mxu0 0
        %1295 = vmatprep.subr.bf16.mxu0 0
        %1296 = vmatpush1.bf16.msra.mxu0 0
        %1297 = vmatprep.subr.bf16.mxu0 0
        %1298 = vmatpush1.bf16.msra.mxu0 0
        %1299 = vmatprep.subr.bf16.mxu0 0
        %1300 = vmatpush1.bf16.msra.mxu0 0
        %1301 = vmatprep.subr.bf16.mxu0 0
        %1302 = vmatpush1.bf16.msra.mxu0 0
        %1303 = vmatprep.subr.bf16.mxu0 0
        %1304 = vmatpush1.bf16.msra.mxu0 0
        %1305 = vmatprep.mubr.bf16.mxu0 0
        %1306 = vmatmul.mubr.bf16.gmra.mrb[0].mxu0 %v1265
        %v1307 = vpop.f32.mrb[0].mxu0
        %v1308 = vadd.f32 0.0, %v1307
        %v1309 = vpop.f32.mrb[0].mxu0
        %v1310 = vadd.f32 0.0, %v1309
        %v1311 = vpop.f32.mrb[0].mxu0
        %v1312 = vpop.f32.mrb[0].mxu0
        %1313 = vdwg.mxu0
        %v1314 = vadd.f32 %v1247, %v1308
        %v1315 = vadd.f32 %v1249, %v1310
        %v1316 = vld [vmem:[%s6] sm:$0xff]
        %1318 = vset.pattern.permute.xlu0 0
        %1319 = vperm.xlu0 %1318, %v1316
        %v1320 = vpop.permute.xlu0 %1319
        %v1322 = vadd.f32 %v1314, %v1320
        %v1323 = vadd.f32 %v1315, %v1320
        %v1324 = vadd.f32 %v1322, %v297
        %v1325 = vadd.f32 %v1323, %v298
        %v1326 = vmax.f32 %v1324, 0.0
        %v1327 = vmax.f32 %v1325, 0.0
        %1328 = vst [vmem:[%s286] sm:$0xff] %v1326
        %1329 = vst [vmem:[%s286 + $0x8] sm:$0xff] %v1327
        %s1330 = sand.u32 %s182, 1
        %s1331 = scalar_lea.sflag [#allocation5], %s1330
        %s1332 = sand.u32 %s182, 1
        %s1333 = smul.addr %s1332, 16
        %s1334 = scalar_lea.vmem [#allocation6], %s1333
        // Predicated region
        $region53: #{tpu_custom_call.1} parent=47 // pred_check
          %p1335 = pneg %p192
        $region54: #{tpu_custom_call.1} parent=47 // pred_check_branch
          %1337 = sbr.rel (%p1335) target = $region56
        $region55: #{tpu_custom_call.1} parent=47 // pred_region
          %s1339 = ssub.s32 256, 256
          %1340 = vsyncadd %s1331, %s1339
          %s1341 = smul.addr %s22, 2
          %s1342 = smul.addr %s1341, 128
          %s1343 = scalar_lea.hbm %s7, %s1342
          %s1345 = sshll.u32 %s1334, 4
          %s1346 = int_to_ptr.vmem [resolvable:$true] %s1345
          %1348 = dma.vmem_to_hbm [thread:$0]  %s1346, 256, %s1343, %s1331
        $region56: #{tpu_custom_call.1} parent=47 // pred_fallthru
          _
      $region48: #{tpu_custom_call.1} parent=5 // pred_fallthru
        _
      %p1349 = scmp.le.s32.totalorder 2, %s17
      // Predicated region
      $region57: #{tpu_custom_call.1} parent=5 // pred_check
        %p1350 = pneg %p1349
      $region58: #{tpu_custom_call.1} parent=5 // pred_check_branch
        %1352 = sbr.rel (%p1350) target = $region60
      $region59: #{tpu_custom_call.1} parent=5 // pred_region
        %s1353 = ssub.s32 %s17, 2
        // Predicated region
        $region61: #{tpu_custom_call.1} parent=59 // pred_check
          %p1354 = pneg %p198
        $region62: #{tpu_custom_call.1} parent=59 // pred_check_branch
          %1356 = sbr.rel (%p1354) target = $region64
        $region63: #{tpu_custom_call.1} parent=59 // pred_region
          %s1357 = sand.u32 %s183, 1
          %s1358 = scalar_lea.sflag [#allocation5], %s1357
          %s1359 = sand.u32 %s183, 1
          %s1360 = smul.addr %s1359, 16
          %s1361 = scalar_lea.vmem [#allocation6], %s1360
          %1362 = dma.done %s1358, 256
        $region64: #{tpu_custom_call.1} parent=59 // pred_fallthru
          _
      $region60: #{tpu_custom_call.1} parent=5 // pred_fallthru
        _
    $region6: #{tpu_custom_call.1} parent=1 // loop_footer
      %s21 = sadd.s32 1, %s17
    $region7: #{tpu_custom_call.1} parent=1 // loop_footer_branch
      %16 = sbr.rel target = $region3
    $region8: #{tpu_custom_call.1} parent=1 // loop_exit
      _
    %1363 = vsyncpa [#allocation4], 1
    %s1364 = scalar_lea.sflag [#allocation4], 1
    %1365 = vsyncpa %s1364, 1
    %1366 = vsyncpa [#allocation5], 1
    %s1367 = scalar_lea.sflag [#allocation5], 1
    %1368 = vsyncpa %s1367, 1

</llo_original>
